<compile_context>
chip_gen: v7x
topology: tpu7x:2x2x1
jax: 0.10.0
libtpu: 0.0.40
codegen_flags: <defaults>
</compile_context>

<pallas_src>
import jax
import jax.numpy as jnp
from jax.experimental import pallas as pl
from jax.experimental.pallas import tpu as pltpu


def _pos_enc_kernel(video_ref, vpos_ref, current_ref, cpos_ref,
                    video_out_ref, current_out_ref):
    # Pure VPU broadcast-adds on lane-dense (rows, width) tiles.
    video_out_ref[...] = video_ref[...] + vpos_ref[...]
    current_out_ref[...] = current_ref[...] + cpos_ref[...]


def _row_tile(n_rows, bytes_per_row, budget_bytes=8 * 1024 * 1024):
    """Pick a batch-row tile: whole batch if it fits, else a multiple of 8 rows."""
    # in + out, double-buffered -> ~4 live copies of each row tile.
    max_rows = max(1, budget_bytes // (4 * bytes_per_row))
    if max_rows >= n_rows:
        return n_rows
    return max(8, (max_rows // 8) * 8)


def positional_encoding(video, current, video_pos_embedding, current_pos_embedding):
    B, F, P, D = video.shape
    _, FR, _ = current.shape
    Wv = F * P * D          # 2048 at the shipped sizes -> multiple of 128
    Wc = FR * D             # 256 at the shipped sizes  -> multiple of 128

    # Layout plumbing only: flatten to lane-dense 2-D views.
    video2 = video.reshape(B, Wv)
    current2 = current.reshape(B, Wc)
    vpos2 = video_pos_embedding.reshape(1, Wv)
    cpos2 = current_pos_embedding.reshape(1, Wc)

    itemsize = jnp.dtype(video.dtype).itemsize
    tb = _row_tile(B, (Wv + Wc) * itemsize)
    grid = (pl.cdiv(B, tb),)

    out_shapes = (
        jax.ShapeDtypeStruct((B, Wv), video.dtype),
        jax.ShapeDtypeStruct((B, Wc), current.dtype),
    )

    vout, cout = pl.pallas_call(
        _pos_enc_kernel,
        out_shape=out_shapes,
        grid_spec=pltpu.PrefetchScalarGridSpec(
            num_scalar_prefetch=0,
            grid=grid,
            in_specs=[
                # video rows: one row-tile per grid step, full lane-dense width
                pl.BlockSpec((tb, Wv), lambda i: (i, 0)),
                # video pos embedding: constant block index -> stays resident in VMEM
                pl.BlockSpec((1, Wv), lambda i: (0, 0)),
                # current rows
                pl.BlockSpec((tb, Wc), lambda i: (i, 0)),
                # current pos embedding: resident
                pl.BlockSpec((1, Wc), lambda i: (0, 0)),
            ],
            out_specs=[
                pl.BlockSpec((tb, Wv), lambda i: (i, 0)),
                pl.BlockSpec((tb, Wc), lambda i: (i, 0)),
            ],
        ),
        compiler_params=pltpu.CompilerParams(
            # batch-row axis is independent -> lets v7x shard it across both TCs.
            dimension_semantics=("parallel",)
        ),
    )(video2, vpos2, current2, cpos2)

    return vout.reshape(B, F, P, D), cout.reshape(B, FR, D)


if __name__ == "__main__":
    # Module hyperparameters (small, consistent with the forward semantics)
    num_frame_patches = 4
    num_image_patches = 16
    embed_dim = 32
    frame = 8
    batch = 2

    key = jax.random.PRNGKey(0)
    k1, k2, k3, k4 = jax.random.split(key, 4)

    # Deterministic "parameter" init (torch.randn equivalents)
    video_pos_embedding = jax.random.normal(
        k1, (1, num_frame_patches, num_image_patches, embed_dim), dtype=jnp.float32)
    current_pos_embedding = jax.random.normal(
        k2, (1, frame, embed_dim), dtype=jnp.float32)

    # Example inputs
    video = jax.random.normal(
        k3, (batch, num_frame_patches, num_image_patches, embed_dim), dtype=jnp.float32)
    current = jax.random.normal(k4, (batch, frame, embed_dim), dtype=jnp.float32)

    video_out, current_out = positional_encoding(
        video, current, video_pos_embedding, current_pos_embedding)
    jax.block_until_ready((video_out, current_out))

    # Verify against plain-JAX reference (broadcast add)
    ref_video = video + video_pos_embedding
    ref_current = current + current_pos_embedding
    assert jnp.allclose(video_out, ref_video, atol=1e-6)
    assert jnp.allclose(current_out, ref_current, atol=1e-6)
    assert video_out.shape == (batch, num_frame_patches, num_image_patches, embed_dim)
    assert current_out.shape == (batch, frame, embed_dim)

    print("KERNEL_OK")
</pallas_src>

<mosaic_0001>
module attributes {stable_mosaic.version = 11 : i64} {
  func.func @_pos_enc_kernel(%arg0: i32, %arg1: memref<2x2048xf32, #tpu.memory_space<vmem>>, %arg2: memref<1x2048xf32, #tpu.memory_space<vmem>>, %arg3: memref<2x256xf32, #tpu.memory_space<vmem>>, %arg4: memref<1x256xf32, #tpu.memory_space<vmem>>, %arg5: memref<2x2048xf32, #tpu.memory_space<vmem>>, %arg6: memref<2x256xf32, #tpu.memory_space<vmem>>) attributes {dimension_semantics = [#tpu.dimension_semantics<parallel>], iteration_bounds = array<i64: 1>, scalar_prefetch = 0 : i64, scratch_operands = 0 : i64, tpu.core_type = #tpu.core_type<tc>, window_params = [{transform_indices = @transform_0, window_bounds = array<i64: 2, 2048>}, {pipeline_mode = #tpu.pipeline_mode<synchronous>, transform_indices = @transform_1, window_bounds = array<i64: 1, 2048>}, {transform_indices = @transform_2, window_bounds = array<i64: 2, 256>}, {pipeline_mode = #tpu.pipeline_mode<synchronous>, transform_indices = @transform_3, window_bounds = array<i64: 1, 256>}, {transform_indices = @transform_4, window_bounds = array<i64: 2, 2048>}, {transform_indices = @transform_5, window_bounds = array<i64: 2, 256>}]} {
    %c0 = arith.constant 0 : index
    %c0_0 = arith.constant 0 : index
    %0 = vector.load %arg1[%c0, %c0_0] : memref<2x2048xf32, #tpu.memory_space<vmem>>, vector<2x2048xf32>
    %c0_1 = arith.constant 0 : index
    %c0_2 = arith.constant 0 : index
    %1 = vector.load %arg2[%c0_1, %c0_2] : memref<1x2048xf32, #tpu.memory_space<vmem>>, vector<1x2048xf32>
    %2 = vector.broadcast %1 : vector<1x2048xf32> to vector<2x2048xf32>
    %3 = arith.addf %0, %2 : vector<2x2048xf32>
    %c0_3 = arith.constant 0 : index
    %c0_4 = arith.constant 0 : index
    %4 = vector.load %arg5[%c0_3, %c0_4] : memref<2x2048xf32, #tpu.memory_space<vmem>>, vector<2x2048xf32>
    tpu.vector_store %arg5[%c0_3, %c0_4], %3 {strides = array<i32>} : memref<2x2048xf32, #tpu.memory_space<vmem>>, vector<2x2048xf32>,
    %c0_5 = arith.constant 0 : index
    %c0_6 = arith.constant 0 : index
    %5 = vector.load %arg3[%c0_5, %c0_6] : memref<2x256xf32, #tpu.memory_space<vmem>>, vector<2x256xf32>
    %c0_7 = arith.constant 0 : index
    %c0_8 = arith.constant 0 : index
    %6 = vector.load %arg4[%c0_7, %c0_8] : memref<1x256xf32, #tpu.memory_space<vmem>>, vector<1x256xf32>
    %7 = vector.broadcast %6 : vector<1x256xf32> to vector<2x256xf32>
    %8 = arith.addf %5, %7 : vector<2x256xf32>
    %c0_9 = arith.constant 0 : index
    %c0_10 = arith.constant 0 : index
    %9 = vector.load %arg6[%c0_9, %c0_10] : memref<2x256xf32, #tpu.memory_space<vmem>>, vector<2x256xf32>
    tpu.vector_store %arg6[%c0_9, %c0_10], %8 {strides = array<i32>} : memref<2x256xf32, #tpu.memory_space<vmem>>, vector<2x256xf32>,
    return
  }
  func.func @transform_0(%arg0: i32) -> (i32, i32) {
    %c0_i32 = arith.constant 0 : i32
    %c0_i32_0 = arith.constant 0 : i32
    return %arg0, %c0_i32 : i32, i32
  }
  func.func @transform_1(%arg0: i32) -> (i32, i32) {
    %c0_i32 = arith.constant 0 : i32
    %c0_i32_0 = arith.constant 0 : i32
    %c0_i32_1 = arith.constant 0 : i32
    return %c0_i32, %c0_i32_0 : i32, i32
  }
  func.func @transform_2(%arg0: i32) -> (i32, i32) {
    %c0_i32 = arith.constant 0 : i32
    %c0_i32_0 = arith.constant 0 : i32
    return %arg0, %c0_i32 : i32, i32
  }
  func.func @transform_3(%arg0: i32) -> (i32, i32) {
    %c0_i32 = arith.constant 0 : i32
    %c0_i32_0 = arith.constant 0 : i32
    %c0_i32_1 = arith.constant 0 : i32
    return %c0_i32, %c0_i32_0 : i32, i32
  }
  func.func @transform_4(%arg0: i32) -> (i32, i32) {
    %c0_i32 = arith.constant 0 : i32
    %c0_i32_0 = arith.constant 0 : i32
    return %arg0, %c0_i32 : i32, i32
  }
  func.func @transform_5(%arg0: i32) -> (i32, i32) {
    %c0_i32 = arith.constant 0 : i32
    %c0_i32_0 = arith.constant 0 : i32
    return %arg0, %c0_i32 : i32, i32
  }
}

</mosaic_0001>

<llo_original>
// kernel: tpu_custom_call.1
$region0: #{tpu_custom_call.1}
  #allocation0 [shape = 'u32[]', space=smem, size = 0x4, offset = 0x4, fixed_abs, tag = 'smem constant byte address 0x4 - core index']
  #allocation1 [shape = 'u32[144,128]{1,0:T(1,128)}', space=vmem, size = 0x12000, scoped, tag = 'internal scratch']
  %s0 = inlined_call_operand.hbm [shape: f32[2,2048], index: 0, kind: input, shape index: {}]
  %s1 = inlined_call_operand.hbm [shape: f32[1,2048], index: 1, kind: input, shape index: {}]
  %s2 = inlined_call_operand.vmem [shape: f32[2,256], index: 2, kind: input, shape index: {}]
  %s3 = inlined_call_operand.vmem [shape: f32[1,256], index: 3, kind: input, shape index: {}]
  %s4 = inlined_call_operand.hbm [shape: f32[2,2048], index: 4, kind: output, shape index: {0}]
  %s5 = inlined_call_operand.hbm [shape: f32[2,256], index: 5, kind: output, shape index: {1}]
  %6 = xla_tuple %s4, %s5
  %s7 = sld [smem:[#allocation0]]
  $region42: #{tpu_custom_call.1} parent=0
    _
  %s9 = ssub.s32 1, %s7
  %s10 = scalar_select 0, %s9, %s7
  $region1: #{tpu_custom_call.1} parent=0
    #allocation2 [shape = 'u8[16384]{0}', space=vmem, size = 0x4000, scoped, tag = 'input window, operand 0, single buffered']
    #allocation3 [shape = 's32[1]{0}', space=sflag, size = 0x4, scoped, tag = 'scoped memory for tpu_custom_call.1']
    #allocation4 [shape = 's32[1]{0}', space=sflag, size = 0x4, scoped, tag = 'scoped memory for tpu_custom_call.1']
    #allocation5 [shape = 'u8[8192]{0}', space=vmem, size = 0x2000, scoped, tag = 'input window, operand 1, single buffered']
    #allocation6 [shape = 's32[1]{0}', space=sflag, size = 0x4, scoped, tag = 'scoped memory for tpu_custom_call.1']
    #allocation7 [shape = 'u8[16384]{0}', space=vmem, size = 0x4000, scoped, tag = 'output window, operand 0, single buffered']
    #allocation8 [shape = 'u8[2048]{0}', space=vmem, size = 0x800, scoped, tag = 'output window, operand 1, single buffered']
    #allocation9 [shape = 's32[1]{0}', space=sflag, size = 0x4, scoped, tag = 'scoped memory for tpu_custom_call.1']
    %11 = vsyncpa [#allocation3], 0
    %12 = vsyncpa [#allocation6], 0
    %13 = vsyncpa [#allocation4], 0
    %14 = vsyncpa [#allocation9], 0
    // Predicated region
    $region2: #{tpu_custom_call.1} parent=1 // pred_check
      _
    $region3: #{tpu_custom_call.1} parent=1 // pred_check_branch
      %16 = sbr.rel (0) target = $region5
    $region4: #{tpu_custom_call.1} parent=1 // pred_region
      %s18 = ssub.s32 512, 512
      %19 = vsyncadd [#allocation3], %s18
      %s21 = sshll.u32 [#allocation2], 4
      %s22 = int_to_ptr.vmem [resolvable:$true] %s21
      %24 = dma.hbm_to_vmem [thread:$0]  %s0, 512, %s22, [#allocation3]
    $region5: #{tpu_custom_call.1} parent=1 // pred_fallthru
      _
    // Predicated region
    $region6: #{tpu_custom_call.1} parent=1 // pred_check
      _
    $region7: #{tpu_custom_call.1} parent=1 // pred_check_branch
      %26 = sbr.rel (0) target = $region9
    $region8: #{tpu_custom_call.1} parent=1 // pred_region
      %s28 = ssub.s32 256, 256
      %29 = vsyncadd [#allocation6], %s28
      %s31 = sshll.u32 [#allocation5], 4
      %s32 = int_to_ptr.vmem [resolvable:$true] %s31
      %34 = dma.hbm_to_vmem [thread:$0]  %s1, 256, %s32, [#allocation6]
    $region9: #{tpu_custom_call.1} parent=1 // pred_fallthru
      _
    // Predicated region
    $region10: #{tpu_custom_call.1} parent=1 // pred_check
      _
    $region11: #{tpu_custom_call.1} parent=1 // pred_check_branch
      %36 = sbr.rel (0) target = $region13
    $region12: #{tpu_custom_call.1} parent=1 // pred_region
      _
    $region13: #{tpu_custom_call.1} parent=1 // pred_fallthru
      _
    // Predicated region
    $region14: #{tpu_custom_call.1} parent=1 // pred_check
      _
    $region15: #{tpu_custom_call.1} parent=1 // pred_check_branch
      %38 = sbr.rel (0) target = $region17
    $region16: #{tpu_custom_call.1} parent=1 // pred_region
      _
    $region17: #{tpu_custom_call.1} parent=1 // pred_fallthru
      _
    // Predicated region
    $region18: #{tpu_custom_call.1} parent=1 // pred_check
      _
    $region19: #{tpu_custom_call.1} parent=1 // pred_check_branch
      %40 = sbr.rel (0) target = $region21
    $region20: #{tpu_custom_call.1} parent=1 // pred_region
      %41 = dma.done [#allocation3], 512
    $region21: #{tpu_custom_call.1} parent=1 // pred_fallthru
      _
    // Predicated region
    $region22: #{tpu_custom_call.1} parent=1 // pred_check
      _
    $region23: #{tpu_custom_call.1} parent=1 // pred_check_branch
      %43 = sbr.rel (0) target = $region25
    $region24: #{tpu_custom_call.1} parent=1 // pred_region
      %44 = dma.done [#allocation6], 256
    $region25: #{tpu_custom_call.1} parent=1 // pred_fallthru
      _
    %v45 = vld [vmem:[#allocation2] sm:$0xff]
    %v46 = vld [vmem:[#allocation2 + $0x8] sm:$0xff]
    %v47 = vld [vmem:[#allocation2 + $0x10] sm:$0xff]
    %v48 = vld [vmem:[#allocation2 + $0x18] sm:$0xff]
    %v49 = vld [vmem:[#allocation5] sm:$0xff]
    %v50 = vld [vmem:[#allocation5 + $0x8] sm:$0xff]
    %v53 = vlaneseq
    %v54 = vshrl.u32 %v53, 7
    %v55 = vsub.s32 0, %v54
    %v56 = vrot.slane %v49, %v55
    %v57 = vlaneseq
    %v58 = vshrl.u32 %v57, 7
    %v59 = vsub.s32 1, %v58
    %v60 = vrot.slane %v49, %v59
    %v61 = vlaneseq
    %v62 = vshrl.u32 %v61, 7
    %v63 = vsub.s32 2, %v62
    %v64 = vrot.slane %v49, %v63
    %v65 = vlaneseq
    %v66 = vshrl.u32 %v65, 7
    %v67 = vsub.s32 3, %v66
    %v68 = vrot.slane %v49, %v67
    %v69 = vlaneseq
    %v70 = vshrl.u32 %v69, 7
    %v71 = vsub.s32 4, %v70
    %v72 = vrot.slane %v49, %v71
    %v73 = vlaneseq
    %v74 = vshrl.u32 %v73, 7
    %v75 = vsub.s32 5, %v74
    %v76 = vrot.slane %v49, %v75
    %v77 = vlaneseq
    %v78 = vshrl.u32 %v77, 7
    %v79 = vsub.s32 6, %v78
    %v80 = vrot.slane %v49, %v79
    %v81 = vlaneseq
    %v82 = vshrl.u32 %v81, 7
    %v83 = vsub.s32 7, %v82
    %v84 = vrot.slane %v49, %v83
    %v85 = vlaneseq
    %v86 = vshrl.u32 %v85, 7
    %v87 = vsub.s32 0, %v86
    %v88 = vrot.slane %v50, %v87
    %v89 = vlaneseq
    %v90 = vshrl.u32 %v89, 7
    %v91 = vsub.s32 1, %v90
    %v92 = vrot.slane %v50, %v91
    %v93 = vlaneseq
    %v94 = vshrl.u32 %v93, 7
    %v95 = vsub.s32 2, %v94
    %v96 = vrot.slane %v50, %v95
    %v97 = vlaneseq
    %v98 = vshrl.u32 %v97, 7
    %v99 = vsub.s32 3, %v98
    %v100 = vrot.slane %v50, %v99
    %v101 = vlaneseq
    %v102 = vshrl.u32 %v101, 7
    %v103 = vsub.s32 4, %v102
    %v104 = vrot.slane %v50, %v103
    %v105 = vlaneseq
    %v106 = vshrl.u32 %v105, 7
    %v107 = vsub.s32 5, %v106
    %v108 = vrot.slane %v50, %v107
    %v109 = vlaneseq
    %v110 = vshrl.u32 %v109, 7
    %v111 = vsub.s32 6, %v110
    %v112 = vrot.slane %v50, %v111
    %v113 = vlaneseq
    %v114 = vshrl.u32 %v113, 7
    %v115 = vsub.s32 7, %v114
    %v116 = vrot.slane %v50, %v115
    %v117 = vcombine.low %v56, %v60
    %v118 = vcombine.low %v64, %v68
    %v120 = vunpack.c.l.s4 1983009808
    %v121 = vunpack.c.0.s8 %v120
    %v122 = vlaneseq
    %v123 = vshrl.u32 %v122, 7
    %v124 = vsub.s32 %v121, %v123
    %v125 = vrot.slane %v117, %v124
    %v127 = vunpack.c.l.s4 1983009808
    %v128 = vunpack.c.0.s8 %v127
    %v129 = vlaneseq
    %v130 = vshrl.u32 %v129, 7
    %v131 = vsub.s32 %v128, %v130
    %v132 = vrot.slane %v118, %v131
    %v133 = vcombine.low %v125, %v132
    %v134 = vcombine.low %v72, %v76
    %v135 = vcombine.low %v80, %v84
    %v137 = vunpack.c.l.s4 1983009808
    %v138 = vunpack.c.0.s8 %v137
    %v139 = vlaneseq
    %v140 = vshrl.u32 %v139, 7
    %v141 = vsub.s32 %v138, %v140
    %v142 = vrot.slane %v134, %v141
    %v144 = vunpack.c.l.s4 1983009808
    %v145 = vunpack.c.0.s8 %v144
    %v146 = vlaneseq
    %v147 = vshrl.u32 %v146, 7
    %v148 = vsub.s32 %v145, %v147
    %v149 = vrot.slane %v135, %v148
    %v150 = vcombine.low %v142, %v149
    %v151 = vcombine.low %v88, %v92
    %v152 = vcombine.low %v96, %v100
    %v154 = vunpack.c.l.s4 1983009808
    %v155 = vunpack.c.0.s8 %v154
    %v156 = vlaneseq
    %v157 = vshrl.u32 %v156, 7
    %v158 = vsub.s32 %v155, %v157
    %v159 = vrot.slane %v151, %v158
    %v161 = vunpack.c.l.s4 1983009808
    %v162 = vunpack.c.0.s8 %v161
    %v163 = vlaneseq
    %v164 = vshrl.u32 %v163, 7
    %v165 = vsub.s32 %v162, %v164
    %v166 = vrot.slane %v152, %v165
    %v167 = vcombine.low %v159, %v166
    %v168 = vcombine.low %v104, %v108
    %v169 = vcombine.low %v112, %v116
    %v171 = vunpack.c.l.s4 1983009808
    %v172 = vunpack.c.0.s8 %v171
    %v173 = vlaneseq
    %v174 = vshrl.u32 %v173, 7
    %v175 = vsub.s32 %v172, %v174
    %v176 = vrot.slane %v168, %v175
    %v178 = vunpack.c.l.s4 1983009808
    %v179 = vunpack.c.0.s8 %v178
    %v180 = vlaneseq
    %v181 = vshrl.u32 %v180, 7
    %v182 = vsub.s32 %v179, %v181
    %v183 = vrot.slane %v169, %v182
    %v184 = vcombine.low %v176, %v183
    %v189 = vadd.f32 %v45, %v133
    %v190 = vadd.f32 %v46, %v150
    %v191 = vadd.f32 %v47, %v167
    %v192 = vadd.f32 %v48, %v184
    %193 = vst [vmem:[#allocation7] sm:$0xff] %v189
    %194 = vst [vmem:[#allocation7 + $0x8] sm:$0xff] %v190
    %195 = vst [vmem:[#allocation7 + $0x10] sm:$0xff] %v191
    %196 = vst [vmem:[#allocation7 + $0x18] sm:$0xff] %v192
    %v197 = vld [vmem:[%s2] sm:$0xf]
    %v198 = vld [vmem:[%s3] sm:$0x3]
    %v200 = vlaneseq
    %v201 = vshrl.u32 %v200, 7
    %v202 = vsub.s32 0, %v201
    %v203 = vrot.slane %v198, %v202
    %v204 = vlaneseq
    %v205 = vshrl.u32 %v204, 7
    %v206 = vsub.s32 1, %v205
    %v207 = vrot.slane %v198, %v206
    %v208 = vcombine.low %v203, %v207
    %v210 = vunpack.c.l.s4 1983009808
    %v211 = vunpack.c.0.s8 %v210
    %v212 = vlaneseq
    %v213 = vshrl.u32 %v212, 7
    %v214 = vsub.s32 %v211, %v213
    %v215 = vrot.slane %v208, %v214
    %v217 = vadd.f32 %v197, %v215
    %218 = vst [vmem:[#allocation8] sm:$0xf] %v217
    // Predicated region
    $region26: #{tpu_custom_call.1} parent=1 // pred_check
      _
    $region27: #{tpu_custom_call.1} parent=1 // pred_check_branch
      %220 = sbr.rel (0) target = $region29
    $region28: #{tpu_custom_call.1} parent=1 // pred_region
      %s222 = ssub.s32 512, 512
      %223 = vsyncadd [#allocation4], %s222
      %s225 = sshll.u32 [#allocation7], 4
      %s226 = int_to_ptr.vmem [resolvable:$true] %s225
      %228 = dma.vmem_to_hbm [thread:$0]  %s226, 512, %s4, [#allocation4]
    $region29: #{tpu_custom_call.1} parent=1 // pred_fallthru
      _
    // Predicated region
    $region30: #{tpu_custom_call.1} parent=1 // pred_check
      _
    $region31: #{tpu_custom_call.1} parent=1 // pred_check_branch
      %230 = sbr.rel (0) target = $region33
    $region32: #{tpu_custom_call.1} parent=1 // pred_region
      %s232 = ssub.s32 64, 64
      %233 = vsyncadd [#allocation9], %s232
      %s235 = sshll.u32 [#allocation8], 4
      %s236 = int_to_ptr.vmem [resolvable:$true] %s235
      %238 = dma.vmem_to_hbm [thread:$0]  %s236, 64, %s5, [#allocation9]
    $region33: #{tpu_custom_call.1} parent=1 // pred_fallthru
      _
    // Predicated region
    $region34: #{tpu_custom_call.1} parent=1 // pred_check
      _
    $region35: #{tpu_custom_call.1} parent=1 // pred_check_branch
      %240 = sbr.rel (0) target = $region37
    $region36: #{tpu_custom_call.1} parent=1 // pred_region
      %241 = dma.done [#allocation4], 512
    $region37: #{tpu_custom_call.1} parent=1 // pred_fallthru
      _
    // Predicated region
    $region38: #{tpu_custom_call.1} parent=1 // pred_check
      _
    $region39: #{tpu_custom_call.1} parent=1 // pred_check_branch
      %243 = sbr.rel (0) target = $region41
    $region40: #{tpu_custom_call.1} parent=1 // pred_region
      %244 = dma.done [#allocation9], 64
    $region41: #{tpu_custom_call.1} parent=1 // pred_fallthru
      _
    %245 = vsyncpa [#allocation3], 1
    %246 = vsyncpa [#allocation6], 1
    %247 = vsyncpa [#allocation4], 1
    %248 = vsyncpa [#allocation9], 1

</llo_original>
